<compile_context>
chip_gen: v7x
topology: tpu7x:2x2x1
jax: 0.10.0
libtpu: 0.0.40
codegen_flags: <defaults>
</compile_context>

<pallas_src>
import functools

import jax
import jax.numpy as jnp
from jax.experimental import pallas as pl
from jax.experimental.pallas import tpu as pltpu

LOG_STD_MAX = 2.0
LOG_STD_MIN = -20.0

_DEFAULT_TILE_B = 1024  # 256-row tiles were per-grid-step-overhead bound


def _round_up(x, m):
    return ((x + m - 1) // m) * m


# ---------------------------------------------------------------------------
# Kernel
# ---------------------------------------------------------------------------
def actor_kernel(x_ref, w1_ref, b1_ref, w2_ref, b2_ref, wh_ref, bh_ref,
                 lo_ref, hi_ref, out_ref, *, head_width):
    x = x_ref[...]                                                    # (tb, S) bf16

    h1 = jnp.dot(x, w1_ref[...], preferred_element_type=jnp.float32) + b1_ref[...]
    h1 = jnp.maximum(h1, 0.0).astype(jnp.bfloat16)                    # (tb, H)

    h2 = jnp.dot(h1, w2_ref[...], preferred_element_type=jnp.float32) + b2_ref[...]
    h2 = jnp.maximum(h2, 0.0).astype(jnp.bfloat16)                    # (tb, H)

    # Fused head: lanes [0, A) are mu, lanes [A, 2A) are log_std, rest is pad.
    head = jnp.dot(h2, wh_ref[...], preferred_element_type=jnp.float32) + bh_ref[...]

    # Clamp via precomputed per-lane bounds: only log_std lanes have finite
    # bounds, so this is 2 VPU ops (no iota / compares / select per tile).
    head = jnp.minimum(jnp.maximum(head, lo_ref[...]), hi_ref[...])

    # Store only the 2*A meaningful lanes -> 16x fewer HBM output bytes.
    out_ref[...] = head[:, :head_width].astype(out_ref.dtype)


# ---------------------------------------------------------------------------
# Parameter preparation (host side, done once): pad + fuse + cast to bf16
# ---------------------------------------------------------------------------
def prepare_actor_params(params):
    w1 = params["w1"]
    b1 = params["b1"].reshape(1, -1)
    w2 = params["w2"]
    b2 = params["b2"].reshape(1, -1)
    wmu = params["wmu"]
    bmu = params["bmu"].reshape(1, -1)
    wls = params["wls"]
    bls = params["bls"].reshape(1, -1)

    S, hid = w1.shape
    A = wmu.shape[1]
    H = _round_up(max(hid, 128), 128)          # padded hidden width (MXU lanes)
    HOUT = _round_up(max(2 * A, 128), 128)     # padded head matmul width

    w1p = jnp.zeros((S, H), jnp.float32).at[:, :hid].set(w1)
    b1p = jnp.zeros((1, H), jnp.float32).at[:, :hid].set(b1)
    w2p = jnp.zeros((H, H), jnp.float32).at[:hid, :hid].set(w2)
    b2p = jnp.zeros((1, H), jnp.float32).at[:, :hid].set(b2)

    wh = jnp.concatenate([wmu, wls], axis=1)   # (hid, 2A)
    bh = jnp.concatenate([bmu, bls], axis=1)   # (1, 2A)
    whp = jnp.zeros((H, HOUT), jnp.float32).at[:hid, :2 * A].set(wh)
    bhp = jnp.zeros((1, HOUT), jnp.float32).at[:, :2 * A].set(bh)

    # Per-lane clamp bounds: finite only on the log_std lanes [A, 2A).
    lo = jnp.full((1, HOUT), -jnp.inf, jnp.float32).at[:, A:2 * A].set(LOG_STD_MIN)
    hi = jnp.full((1, HOUT), jnp.inf, jnp.float32).at[:, A:2 * A].set(LOG_STD_MAX)

    return {
        "w1": w1p.astype(jnp.bfloat16), "b1": b1p,
        "w2": w2p.astype(jnp.bfloat16), "b2": b2p,
        "wh": whp.astype(jnp.bfloat16), "bh": bhp,
        "lo": lo, "hi": hi,
        "state_size": S, "action_size": A,
        "hidden_pad": H, "head_mm_pad": HOUT,
    }


# ---------------------------------------------------------------------------
# Wrapper
# ---------------------------------------------------------------------------
def actor_forward(state, prepared, tile_b=_DEFAULT_TILE_B):
    B, S = state.shape
    A = prepared["action_size"]
    H = prepared["hidden_pad"]
    HOUT = prepared["head_mm_pad"]
    OUT_W = 2 * A                                  # lane-width of the HBM output

    # Batch tile: multiple of 16 (bf16 sublane packing), no bigger than needed.
    tb = min(tile_b, _round_up(max(B, 1), 16))
    # Keep >= 2 grid steps for large single-tile batches so v7x's two
    # TensorCores both get work (harmless on v5e/v6e).
    if _round_up(B, tb) == tb and tb >= 512:
        tb = _round_up((tb + 1) // 2, 16)
    pB = _round_up(B, tb)

    x = state
    if pB != B:
        x = jnp.pad(x, ((0, pB - B), (0, 0)))
    x = x.astype(jnp.bfloat16)

    grid = (pB // tb,)
    kernel = functools.partial(actor_kernel, head_width=OUT_W)

    weight_bytes = (prepared["w1"].size + prepared["w2"].size
                    + prepared["wh"].size) * 2 \
                   + (prepared["b1"].size + prepared["b2"].size
                      + prepared["bh"].size + prepared["lo"].size
                      + prepared["hi"].size) * 4
    cost = pl.CostEstimate(
        flops=2 * pB * (S * H + H * H + H * HOUT),
        transcendentals=0,
        bytes_accessed=x.size * 2 + pB * OUT_W * 4 + weight_bytes,
    )

    out = pl.pallas_call(
        kernel,
        out_shape=jax.ShapeDtypeStruct((pB, OUT_W), jnp.float32),
        grid_spec=pltpu.PrefetchScalarGridSpec(
            num_scalar_prefetch=0,
            grid=grid,
            in_specs=[
                pl.BlockSpec((tb, S), lambda i: (i, 0)),      # state tile
                pl.BlockSpec((S, H), lambda i: (0, 0)),       # w1 (resident)
                pl.BlockSpec((1, H), lambda i: (0, 0)),       # b1
                pl.BlockSpec((H, H), lambda i: (0, 0)),       # w2
                pl.BlockSpec((1, H), lambda i: (0, 0)),       # b2
                pl.BlockSpec((H, HOUT), lambda i: (0, 0)),    # fused head W
                pl.BlockSpec((1, HOUT), lambda i: (0, 0)),    # fused head b
                pl.BlockSpec((1, HOUT), lambda i: (0, 0)),    # clamp lo
                pl.BlockSpec((1, HOUT), lambda i: (0, 0)),    # clamp hi
            ],
            out_specs=pl.BlockSpec((tb, OUT_W), lambda i: (i, 0)),
        ),
        compiler_params=pltpu.CompilerParams(
            dimension_semantics=("parallel",),
            vmem_limit_bytes=32 * 1024 * 1024,
        ),
        cost_estimate=cost,
    )(x, prepared["w1"], prepared["b1"], prepared["w2"], prepared["b2"],
      prepared["wh"], prepared["bh"], prepared["lo"], prepared["hi"])

    mu = out[:B, :A]
    log_std = out[:B, A:2 * A]
    return mu, log_std


# ---------------------------------------------------------------------------
# Init (matches torch.nn.init.xavier_uniform_ gain=1 / zero bias) + reference
# ---------------------------------------------------------------------------
def xavier_uniform(key, fan_in, fan_out):
    bound = jnp.sqrt(6.0 / (fan_in + fan_out))
    return jax.random.uniform(key, (fan_in, fan_out), jnp.float32, -bound, bound)


def init_actor_params(key, state_size, action_size, hidden=64):
    k1, k2, k3, k4 = jax.random.split(key, 4)
    return {
        "w1": xavier_uniform(k1, state_size, hidden),
        "b1": jnp.zeros((1, hidden), jnp.float32),
        "w2": xavier_uniform(k2, hidden, hidden),
        "b2": jnp.zeros((1, hidden), jnp.float32),
        "wmu": xavier_uniform(k3, hidden, action_size),
        "bmu": jnp.zeros((1, action_size), jnp.float32),
        "wls": xavier_uniform(k4, hidden, action_size),
        "bls": jnp.zeros((1, action_size), jnp.float32),
    }


def actor_forward_ref(state, params):
    h1 = jnp.maximum(state @ params["w1"] + params["b1"], 0.0)
    h2 = jnp.maximum(h1 @ params["w2"] + params["b2"], 0.0)
    mu = h2 @ params["wmu"] + params["bmu"]
    log_std = jnp.clip(h2 @ params["wls"] + params["bls"], LOG_STD_MIN, LOG_STD_MAX)
    return mu, log_std


# TODO(synk): `get_action` (rsample + tanh squashing + log_prob) is left to the
# caller; only the module's `forward` is implemented as a Pallas kernel.

if __name__ == "__main__":
    key = jax.random.PRNGKey(0)
    k_param, k_state = jax.random.split(key)

    state_size, action_size, hidden, batch = 8, 4, 64, 2

    params = init_actor_params(k_param, state_size, action_size, hidden)
    prepared = prepare_actor_params(params)
    state = jax.random.normal(k_state, (batch, state_size), jnp.float32)

    mu, log_std = actor_forward(state, prepared)
    jax.block_until_ready((mu, log_std))

    mu_ref, log_std_ref = actor_forward_ref(state, params)
    assert mu.shape == (batch, action_size)
    assert log_std.shape == (batch, action_size)
    # bf16 weights -> loose-but-meaningful tolerance vs the f32 reference
    assert jnp.allclose(mu, mu_ref, atol=3e-2, rtol=3e-2), "mu mismatch"
    assert jnp.allclose(log_std, log_std_ref, atol=3e-2, rtol=3e-2), "log_std mismatch"

    print("KERNEL_OK")
</pallas_src>

<mosaic_0001>
module attributes {stable_mosaic.version = 11 : i64} {
  func.func @actor_kernel(%arg0: i32, %arg1: memref<16x8xbf16, #tpu.memory_space<vmem>>, %arg2: memref<8x128xbf16, #tpu.memory_space<vmem>>, %arg3: memref<1x128xf32, #tpu.memory_space<vmem>>, %arg4: memref<128x128xbf16, #tpu.memory_space<vmem>>, %arg5: memref<1x128xf32, #tpu.memory_space<vmem>>, %arg6: memref<128x128xbf16, #tpu.memory_space<vmem>>, %arg7: memref<1x128xf32, #tpu.memory_space<vmem>>, %arg8: memref<1x128xf32, #tpu.memory_space<vmem>>, %arg9: memref<1x128xf32, #tpu.memory_space<vmem>>, %arg10: memref<16x8xf32, #tpu.memory_space<vmem>>) attributes {dimension_semantics = [#tpu.dimension_semantics<parallel>], iteration_bounds = array<i64: 1>, scalar_prefetch = 0 : i64, scratch_operands = 0 : i64, tpu.core_type = #tpu.core_type<tc>, window_params = [{transform_indices = @transform_0, window_bounds = array<i64: 16, 8>}, {pipeline_mode = #tpu.pipeline_mode<synchronous>, transform_indices = @transform_1, window_bounds = array<i64: 8, 128>}, {pipeline_mode = #tpu.pipeline_mode<synchronous>, transform_indices = @transform_2, window_bounds = array<i64: 1, 128>}, {pipeline_mode = #tpu.pipeline_mode<synchronous>, transform_indices = @transform_3, window_bounds = array<i64: 128, 128>}, {pipeline_mode = #tpu.pipeline_mode<synchronous>, transform_indices = @transform_4, window_bounds = array<i64: 1, 128>}, {pipeline_mode = #tpu.pipeline_mode<synchronous>, transform_indices = @transform_5, window_bounds = array<i64: 128, 128>}, {pipeline_mode = #tpu.pipeline_mode<synchronous>, transform_indices = @transform_6, window_bounds = array<i64: 1, 128>}, {pipeline_mode = #tpu.pipeline_mode<synchronous>, transform_indices = @transform_7, window_bounds = array<i64: 1, 128>}, {pipeline_mode = #tpu.pipeline_mode<synchronous>, transform_indices = @transform_8, window_bounds = array<i64: 1, 128>}, {transform_indices = @transform_9, window_bounds = array<i64: 16, 8>}]} {
    %c0 = arith.constant 0 : index
    %c0_0 = arith.constant 0 : index
    %0 = vector.load %arg1[%c0, %c0_0] : memref<16x8xbf16, #tpu.memory_space<vmem>>, vector<16x8xbf16>
    %c0_1 = arith.constant 0 : index
    %c0_2 = arith.constant 0 : index
    %1 = vector.load %arg2[%c0_1, %c0_2] : memref<8x128xbf16, #tpu.memory_space<vmem>>, vector<8x128xbf16>
    %cst = arith.constant dense<0.000000e+00> : vector<16x128xf32>
    %2 = tpu.matmul %0, %1, %cst {dimension_numbers = #tpu.dot_dimension_numbers<[1], [0], [0], [1], [0, 0, 1, 1], [], []>} : vector<16x8xbf16>, vector<8x128xbf16>, vector<16x128xf32> -> vector<16x128xf32>
    %c0_3 = arith.constant 0 : index
    %c0_4 = arith.constant 0 : index
    %3 = vector.load %arg3[%c0_3, %c0_4] : memref<1x128xf32, #tpu.memory_space<vmem>>, vector<1x128xf32>
    %4 = vector.broadcast %3 : vector<1x128xf32> to vector<16x128xf32>
    %5 = arith.addf %2, %4 : vector<16x128xf32>
    %cst_5 = arith.constant 0.000000e+00 : f32
    %6 = vector.broadcast %cst_5 : f32 to vector<16x128xf32>
    %7 = arith.maximumf %5, %6 : vector<16x128xf32>
    %8 = arith.truncf %7 : vector<16x128xf32> to vector<16x128xbf16>
    %c0_6 = arith.constant 0 : index
    %c0_7 = arith.constant 0 : index
    %9 = vector.load %arg4[%c0_6, %c0_7] : memref<128x128xbf16, #tpu.memory_space<vmem>>, vector<128x128xbf16>
    %cst_8 = arith.constant dense<0.000000e+00> : vector<16x128xf32>
    %10 = tpu.matmul %8, %9, %cst_8 {dimension_numbers = #tpu.dot_dimension_numbers<[1], [0], [0], [1], [0, 0, 1, 1], [], []>} : vector<16x128xbf16>, vector<128x128xbf16>, vector<16x128xf32> -> vector<16x128xf32>
    %c0_9 = arith.constant 0 : index
    %c0_10 = arith.constant 0 : index
    %11 = vector.load %arg5[%c0_9, %c0_10] : memref<1x128xf32, #tpu.memory_space<vmem>>, vector<1x128xf32>
    %12 = vector.broadcast %11 : vector<1x128xf32> to vector<16x128xf32>
    %13 = arith.addf %10, %12 : vector<16x128xf32>
    %cst_11 = arith.constant 0.000000e+00 : f32
    %14 = vector.broadcast %cst_11 : f32 to vector<16x128xf32>
    %15 = arith.maximumf %13, %14 : vector<16x128xf32>
    %16 = arith.truncf %15 : vector<16x128xf32> to vector<16x128xbf16>
    %c0_12 = arith.constant 0 : index
    %c0_13 = arith.constant 0 : index
    %17 = vector.load %arg6[%c0_12, %c0_13] : memref<128x128xbf16, #tpu.memory_space<vmem>>, vector<128x128xbf16>
    %cst_14 = arith.constant dense<0.000000e+00> : vector<16x128xf32>
    %18 = tpu.matmul %16, %17, %cst_14 {dimension_numbers = #tpu.dot_dimension_numbers<[1], [0], [0], [1], [0, 0, 1, 1], [], []>} : vector<16x128xbf16>, vector<128x128xbf16>, vector<16x128xf32> -> vector<16x128xf32>
    %c0_15 = arith.constant 0 : index
    %c0_16 = arith.constant 0 : index
    %19 = vector.load %arg7[%c0_15, %c0_16] : memref<1x128xf32, #tpu.memory_space<vmem>>, vector<1x128xf32>
    %20 = vector.broadcast %19 : vector<1x128xf32> to vector<16x128xf32>
    %21 = arith.addf %18, %20 : vector<16x128xf32>
    %c0_17 = arith.constant 0 : index
    %c0_18 = arith.constant 0 : index
    %22 = vector.load %arg8[%c0_17, %c0_18] : memref<1x128xf32, #tpu.memory_space<vmem>>, vector<1x128xf32>
    %23 = vector.broadcast %22 : vector<1x128xf32> to vector<16x128xf32>
    %24 = arith.maximumf %21, %23 : vector<16x128xf32>
    %c0_19 = arith.constant 0 : index
    %c0_20 = arith.constant 0 : index
    %25 = vector.load %arg9[%c0_19, %c0_20] : memref<1x128xf32, #tpu.memory_space<vmem>>, vector<1x128xf32>
    %26 = vector.broadcast %25 : vector<1x128xf32> to vector<16x128xf32>
    %27 = arith.minimumf %24, %26 : vector<16x128xf32>
    %28 = vector.extract_strided_slice %27 {offsets = [0, 0], sizes = [16, 8], strides = [1, 1]} : vector<16x128xf32> to vector<16x8xf32>
    %c0_21 = arith.constant 0 : index
    %c0_22 = arith.constant 0 : index
    %29 = vector.load %arg10[%c0_21, %c0_22] : memref<16x8xf32, #tpu.memory_space<vmem>>, vector<16x8xf32>
    tpu.vector_store %arg10[%c0_21, %c0_22], %28 {strides = array<i32>} : memref<16x8xf32, #tpu.memory_space<vmem>>, vector<16x8xf32>,
    return
  }
  func.func @transform_0(%arg0: i32) -> (i32, i32) {
    %c0_i32 = arith.constant 0 : i32
    %c0_i32_0 = arith.constant 0 : i32
    return %arg0, %c0_i32 : i32, i32
  }
  func.func @transform_1(%arg0: i32) -> (i32, i32) {
    %c0_i32 = arith.constant 0 : i32
    %c0_i32_0 = arith.constant 0 : i32
    %c0_i32_1 = arith.constant 0 : i32
    return %c0_i32, %c0_i32_0 : i32, i32
  }
  func.func @transform_2(%arg0: i32) -> (i32, i32) {
    %c0_i32 = arith.constant 0 : i32
    %c0_i32_0 = arith.constant 0 : i32
    %c0_i32_1 = arith.constant 0 : i32
    return %c0_i32, %c0_i32_0 : i32, i32
  }
  func.func @transform_3(%arg0: i32) -> (i32, i32) {
    %c0_i32 = arith.constant 0 : i32
    %c0_i32_0 = arith.constant 0 : i32
    %c0_i32_1 = arith.constant 0 : i32
    return %c0_i32, %c0_i32_0 : i32, i32
  }
  func.func @transform_4(%arg0: i32) -> (i32, i32) {
    %c0_i32 = arith.constant 0 : i32
    %c0_i32_0 = arith.constant 0 : i32
    %c0_i32_1 = arith.constant 0 : i32
    return %c0_i32, %c0_i32_0 : i32, i32
  }
  func.func @transform_5(%arg0: i32) -> (i32, i32) {
    %c0_i32 = arith.constant 0 : i32
    %c0_i32_0 = arith.constant 0 : i32
    %c0_i32_1 = arith.constant 0 : i32
    return %c0_i32, %c0_i32_0 : i32, i32
  }
  func.func @transform_6(%arg0: i32) -> (i32, i32) {
    %c0_i32 = arith.constant 0 : i32
    %c0_i32_0 = arith.constant 0 : i32
    %c0_i32_1 = arith.constant 0 : i32
    return %c0_i32, %c0_i32_0 : i32, i32
  }
  func.func @transform_7(%arg0: i32) -> (i32, i32) {
    %c0_i32 = arith.constant 0 : i32
    %c0_i32_0 = arith.constant 0 : i32
    %c0_i32_1 = arith.constant 0 : i32
    return %c0_i32, %c0_i32_0 : i32, i32
  }
  func.func @transform_8(%arg0: i32) -> (i32, i32) {
    %c0_i32 = arith.constant 0 : i32
    %c0_i32_0 = arith.constant 0 : i32
    %c0_i32_1 = arith.constant 0 : i32
    return %c0_i32, %c0_i32_0 : i32, i32
  }
  func.func @transform_9(%arg0: i32) -> (i32, i32) {
    %c0_i32 = arith.constant 0 : i32
    %c0_i32_0 = arith.constant 0 : i32
    return %arg0, %c0_i32 : i32, i32
  }
}

</mosaic_0001>

<llo_original>
// kernel: tpu_custom_call.1
$region0: #{tpu_custom_call.1}
  #allocation0 [shape = 'u32[]', space=smem, size = 0x4, offset = 0x4, fixed_abs, tag = 'smem constant byte address 0x4 - core index']
  #allocation1 [shape = 'u32[144,128]{1,0:T(1,128)}', space=vmem, size = 0x12000, scoped, tag = 'internal scratch']
  %s0 = inlined_call_operand.vmem [shape: bf16[16,8], index: 0, kind: input, shape index: {}]
  %s1 = inlined_call_operand.vmem [shape: bf16[8,128], index: 1, kind: input, shape index: {}]
  %s2 = inlined_call_operand.vmem [shape: f32[1,128], index: 2, kind: input, shape index: {}]
  %s3 = inlined_call_operand.hbm [shape: bf16[128,128], index: 3, kind: input, shape index: {}]
  %s4 = inlined_call_operand.vmem [shape: f32[1,128], index: 4, kind: input, shape index: {}]
  %s5 = inlined_call_operand.hbm [shape: bf16[128,128], index: 5, kind: input, shape index: {}]
  %s6 = inlined_call_operand.vmem [shape: f32[1,128], index: 6, kind: input, shape index: {}]
  %s7 = inlined_call_operand.vmem [shape: f32[1,128], index: 7, kind: input, shape index: {}]
  %s8 = inlined_call_operand.vmem [shape: f32[1,128], index: 8, kind: input, shape index: {}]
  %s9 = inlined_call_operand.vmem [shape: f32[16,8], index: 9, kind: output, shape index: {}]
  %s10 = sld [smem:[#allocation0]]
  $region54: #{tpu_custom_call.1} parent=0
    _
  %s12 = ssub.s32 1, %s10
  %s13 = scalar_select 0, %s12, %s10
  $region1: #{tpu_custom_call.1} parent=0
    #allocation2 [shape = 'u8[32768]{0}', space=vmem, size = 0x8000, scoped, tag = 'input window, operand 3, single buffered']
    #allocation3 [shape = 's32[1]{0}', space=sflag, size = 0x4, scoped, tag = 'scoped memory for tpu_custom_call.1']
    #allocation4 [shape = 'u8[32768]{0}', space=vmem, size = 0x8000, scoped, tag = 'input window, operand 5, single buffered']
    #allocation5 [shape = 's32[1]{0}', space=sflag, size = 0x4, scoped, tag = 'scoped memory for tpu_custom_call.1']
    %14 = vsyncpa [#allocation3], 0
    %15 = vsyncpa [#allocation5], 0
    // Predicated region
    $region2: #{tpu_custom_call.1} parent=1 // pred_check
      _
    $region3: #{tpu_custom_call.1} parent=1 // pred_check_branch
      %17 = sbr.rel (0) target = $region5
    $region4: #{tpu_custom_call.1} parent=1 // pred_region
      _
    $region5: #{tpu_custom_call.1} parent=1 // pred_fallthru
      _
    // Predicated region
    $region6: #{tpu_custom_call.1} parent=1 // pred_check
      _
    $region7: #{tpu_custom_call.1} parent=1 // pred_check_branch
      %19 = sbr.rel (0) target = $region9
    $region8: #{tpu_custom_call.1} parent=1 // pred_region
      _
    $region9: #{tpu_custom_call.1} parent=1 // pred_fallthru
      _
    // Predicated region
    $region10: #{tpu_custom_call.1} parent=1 // pred_check
      _
    $region11: #{tpu_custom_call.1} parent=1 // pred_check_branch
      %21 = sbr.rel (0) target = $region13
    $region12: #{tpu_custom_call.1} parent=1 // pred_region
      _
    $region13: #{tpu_custom_call.1} parent=1 // pred_fallthru
      _
    // Predicated region
    $region14: #{tpu_custom_call.1} parent=1 // pred_check
      _
    $region15: #{tpu_custom_call.1} parent=1 // pred_check_branch
      %23 = sbr.rel (0) target = $region17
    $region16: #{tpu_custom_call.1} parent=1 // pred_region
      %s25 = ssub.s32 1024, 1024
      %26 = vsyncadd [#allocation3], %s25
      %s27 = sshll.u32 [#allocation2], 4
      %s28 = int_to_ptr.vmem [resolvable:$true] %s27
      %33 = dma.hbm_to_vmem [thread:$0]  %s3, 1024, %s28, [#allocation3], 64, 64, 4
    $region17: #{tpu_custom_call.1} parent=1 // pred_fallthru
      _
    // Predicated region
    $region18: #{tpu_custom_call.1} parent=1 // pred_check
      _
    $region19: #{tpu_custom_call.1} parent=1 // pred_check_branch
      %35 = sbr.rel (0) target = $region21
    $region20: #{tpu_custom_call.1} parent=1 // pred_region
      _
    $region21: #{tpu_custom_call.1} parent=1 // pred_fallthru
      _
    // Predicated region
    $region22: #{tpu_custom_call.1} parent=1 // pred_check
      _
    $region23: #{tpu_custom_call.1} parent=1 // pred_check_branch
      %37 = sbr.rel (0) target = $region25
    $region24: #{tpu_custom_call.1} parent=1 // pred_region
      %s39 = ssub.s32 1024, 1024
      %40 = vsyncadd [#allocation5], %s39
      %s41 = sshll.u32 [#allocation4], 4
      %s42 = int_to_ptr.vmem [resolvable:$true] %s41
      %47 = dma.hbm_to_vmem [thread:$0]  %s5, 1024, %s42, [#allocation5], 64, 64, 4
    $region25: #{tpu_custom_call.1} parent=1 // pred_fallthru
      _
    // Predicated region
    $region26: #{tpu_custom_call.1} parent=1 // pred_check
      _
    $region27: #{tpu_custom_call.1} parent=1 // pred_check_branch
      %49 = sbr.rel (0) target = $region29
    $region28: #{tpu_custom_call.1} parent=1 // pred_region
      _
    $region29: #{tpu_custom_call.1} parent=1 // pred_fallthru
      _
    // Predicated region
    $region30: #{tpu_custom_call.1} parent=1 // pred_check
      _
    $region31: #{tpu_custom_call.1} parent=1 // pred_check_branch
      %51 = sbr.rel (0) target = $region33
    $region32: #{tpu_custom_call.1} parent=1 // pred_region
      _
    $region33: #{tpu_custom_call.1} parent=1 // pred_fallthru
      _
    // Predicated region
    $region34: #{tpu_custom_call.1} parent=1 // pred_check
      _
    $region35: #{tpu_custom_call.1} parent=1 // pred_check_branch
      %53 = sbr.rel (0) target = $region37
    $region36: #{tpu_custom_call.1} parent=1 // pred_region
      _
    $region37: #{tpu_custom_call.1} parent=1 // pred_fallthru
      _
    // Predicated region
    $region38: #{tpu_custom_call.1} parent=1 // pred_check
      _
    $region39: #{tpu_custom_call.1} parent=1 // pred_check_branch
      %55 = sbr.rel (0) target = $region41
    $region40: #{tpu_custom_call.1} parent=1 // pred_region
      %56 = dma.done [#allocation3], 1024
    $region41: #{tpu_custom_call.1} parent=1 // pred_fallthru
      _
    // Predicated region
    $region42: #{tpu_custom_call.1} parent=1 // pred_check
      _
    $region43: #{tpu_custom_call.1} parent=1 // pred_check_branch
      %58 = sbr.rel (0) target = $region45
    $region44: #{tpu_custom_call.1} parent=1 // pred_region
      %59 = dma.done [#allocation5], 1024
    $region45: #{tpu_custom_call.1} parent=1 // pred_fallthru
      _
    %v61 = vld [vmem:[%s0] sm:$0xf]
    %v62 = vld [vmem:[%s0 + $0x4] sm:$0xf]
    %v63 = vld [vmem:[%s1] sm:$0xf]
    %v64 = vld [vmem:[%s2] sm:$0x1]
    %v66 = vlaneseq
    %v67 = vshrl.u32 %v66, 7
    %v68 = vsub.s32 0, %v67
    %v69 = vrot.slane %v64, %v68
    %v73 = vunpack.c.l.b16 %v61
    %v74 = vunpack.c.l.b16 %v62
    %v75 = vpack.c.b16 %v74, %v73
    %vm76 = vcmask 64512
    %v78 = vsel %vm76, %v75, 0
    %vm80 = vcmask 1043456
    %v82 = vsel %vm80, %v63, 0
    %84 = vmatprep.subr.bf16.mxu0 0
    %85 = vmatpush1.bf16.msra.mxu0 %v82
    %86 = vmatprep.subr.bf16.mxu0 0
    %87 = vmatpush1.bf16.msra.mxu0 0
    %88 = vmatprep.subr.bf16.mxu0 0
    %89 = vmatpush1.bf16.msra.mxu0 0
    %90 = vmatprep.subr.bf16.mxu0 0
    %91 = vmatpush1.bf16.msra.mxu0 0
    %92 = vmatprep.subr.bf16.mxu0 0
    %93 = vmatpush1.bf16.msra.mxu0 0
    %94 = vmatprep.subr.bf16.mxu0 0
    %95 = vmatpush1.bf16.msra.mxu0 0
    %96 = vmatprep.subr.bf16.mxu0 0
    %97 = vmatpush1.bf16.msra.mxu0 0
    %98 = vmatprep.subr.bf16.mxu0 0
    %99 = vmatpush1.bf16.msra.mxu0 0
    %100 = vmatprep.subr.bf16.mxu0 0
    %101 = vmatpush1.bf16.msra.mxu0 0
    %102 = vmatprep.subr.bf16.mxu0 0
    %103 = vmatpush1.bf16.msra.mxu0 0
    %104 = vmatprep.subr.bf16.mxu0 0
    %105 = vmatpush1.bf16.msra.mxu0 0
    %106 = vmatprep.subr.bf16.mxu0 0
    %107 = vmatpush1.bf16.msra.mxu0 0
    %108 = vmatprep.subr.bf16.mxu0 0
    %109 = vmatpush1.bf16.msra.mxu0 0
    %110 = vmatprep.subr.bf16.mxu0 0
    %111 = vmatpush1.bf16.msra.mxu0 0
    %112 = vmatprep.subr.bf16.mxu0 0
    %113 = vmatpush1.bf16.msra.mxu0 0
    %114 = vmatprep.subr.bf16.mxu0 0
    %115 = vmatpush1.bf16.msra.mxu0 0
    %116 = vmatprep.mubr.bf16.mxu0 0
    %117 = vmatmul.mubr.bf16.gmra.mrb[0].mxu0 %v78
    %v118 = vpop.f32.mrb[0].mxu0
    %v119 = vadd.f32 %v69, %v118
    %v120 = vpop.f32.mrb[0].mxu0
    %v121 = vpop.f32.mrb[0].mxu0
    %v122 = vadd.f32 %v69, %v121
    %v123 = vpop.f32.mrb[0].mxu0
    %124 = vdwg.mxu0
    %v125 = vmax.f32 %v119, 0.0
    %v126 = vmax.f32 %v122, 0.0
    %v127 = vpack.c.bf16 %v126, %v125
    %v128 = vld [vmem:[#allocation2] sm:$0xf]
    %v129 = vld [vmem:[#allocation2 + $0x4] sm:$0xf]
    %v130 = vld [vmem:[#allocation2 + $0x8] sm:$0xf]
    %v131 = vld [vmem:[#allocation2 + $0xc] sm:$0xf]
    %v132 = vld [vmem:[#allocation2 + $0x10] sm:$0xf]
    %v133 = vld [vmem:[#allocation2 + $0x14] sm:$0xf]
    %v134 = vld [vmem:[#allocation2 + $0x18] sm:$0xf]
    %v135 = vld [vmem:[#allocation2 + $0x1c] sm:$0xf]
    %v136 = vld [vmem:[#allocation2 + $0x20] sm:$0xf]
    %v137 = vld [vmem:[#allocation2 + $0x24] sm:$0xf]
    %v138 = vld [vmem:[#allocation2 + $0x28] sm:$0xf]
    %v139 = vld [vmem:[#allocation2 + $0x2c] sm:$0xf]
    %v140 = vld [vmem:[#allocation2 + $0x30] sm:$0xf]
    %v141 = vld [vmem:[#allocation2 + $0x34] sm:$0xf]
    %v142 = vld [vmem:[#allocation2 + $0x38] sm:$0xf]
    %v143 = vld [vmem:[#allocation2 + $0x3c] sm:$0xf]
    %v144 = vld [vmem:[%s4] sm:$0x1]
    %v146 = vlaneseq
    %v147 = vshrl.u32 %v146, 7
    %v148 = vsub.s32 0, %v147
    %v149 = vrot.slane %v144, %v148
    %v167 = vunpack.c.l.b16 %v128
    %v168 = vunpack.c.l.b16 %v129
    %v169 = vunpack.c.l.b16 %v130
    %v170 = vunpack.c.l.b16 %v131
    %v171 = vunpack.c.l.b16 %v132
    %v172 = vunpack.c.l.b16 %v133
    %v173 = vunpack.c.l.b16 %v134
    %v174 = vunpack.c.l.b16 %v135
    %v175 = vunpack.c.l.b16 %v136
    %v176 = vunpack.c.l.b16 %v137
    %v177 = vunpack.c.l.b16 %v138
    %v178 = vunpack.c.l.b16 %v139
    %v179 = vunpack.c.l.b16 %v140
    %v180 = vunpack.c.l.b16 %v141
    %v181 = vunpack.c.l.b16 %v142
    %v182 = vunpack.c.l.b16 %v143
    %v183 = vpack.c.b16 %v168, %v167
    %v184 = vpack.c.b16 %v170, %v169
    %v185 = vpack.c.b16 %v172, %v171
    %v186 = vpack.c.b16 %v174, %v173
    %v187 = vpack.c.b16 %v176, %v175
    %v188 = vpack.c.b16 %v178, %v177
    %v189 = vpack.c.b16 %v180, %v179
    %v190 = vpack.c.b16 %v182, %v181
    %199 = vmatprep.subr.bf16.mxu0 0
    %200 = vmatpush1.bf16.msra.mxu0 %v183
    %201 = vmatprep.subr.bf16.mxu0 0
    %202 = vmatpush1.bf16.msra.mxu0 %v184
    %203 = vmatprep.subr.bf16.mxu0 0
    %204 = vmatpush1.bf16.msra.mxu0 %v185
    %205 = vmatprep.subr.bf16.mxu0 0
    %206 = vmatpush1.bf16.msra.mxu0 %v186
    %207 = vmatprep.subr.bf16.mxu0 0
    %208 = vmatpush1.bf16.msra.mxu0 %v187
    %209 = vmatprep.subr.bf16.mxu0 0
    %210 = vmatpush1.bf16.msra.mxu0 %v188
    %211 = vmatprep.subr.bf16.mxu0 0
    %212 = vmatpush1.bf16.msra.mxu0 %v189
    %213 = vmatprep.subr.bf16.mxu0 0
    %214 = vmatpush1.bf16.msra.mxu0 %v190
    %215 = vmatprep.subr.bf16.mxu0 0
    %216 = vmatpush1.bf16.msra.mxu0 0
    %217 = vmatprep.subr.bf16.mxu0 0
    %218 = vmatpush1.bf16.msra.mxu0 0
    %219 = vmatprep.subr.bf16.mxu0 0
    %220 = vmatpush1.bf16.msra.mxu0 0
    %221 = vmatprep.subr.bf16.mxu0 0
    %222 = vmatpush1.bf16.msra.mxu0 0
    %223 = vmatprep.subr.bf16.mxu0 0
    %224 = vmatpush1.bf16.msra.mxu0 0
    %225 = vmatprep.subr.bf16.mxu0 0
    %226 = vmatpush1.bf16.msra.mxu0 0
    %227 = vmatprep.subr.bf16.mxu0 0
    %228 = vmatpush1.bf16.msra.mxu0 0
    %229 = vmatprep.subr.bf16.mxu0 0
    %230 = vmatpush1.bf16.msra.mxu0 0
    %231 = vmatprep.mubr.bf16.mxu0 0
    %232 = vmatmul.mubr.bf16.gmra.mrb[0].mxu0 %v127
    %v233 = vpop.f32.mrb[0].mxu0
    %v234 = vadd.f32 %v149, %v233
    %v235 = vpop.f32.mrb[0].mxu0
    %v236 = vpop.f32.mrb[0].mxu0
    %v237 = vadd.f32 %v149, %v236
    %v238 = vpop.f32.mrb[0].mxu0
    %239 = vdwg.mxu0
    %v240 = vmax.f32 %v234, 0.0
    %v241 = vmax.f32 %v237, 0.0
    %v242 = vpack.c.bf16 %v241, %v240
    %v243 = vld [vmem:[#allocation4] sm:$0xf]
    %v244 = vld [vmem:[#allocation4 + $0x4] sm:$0xf]
    %v245 = vld [vmem:[#allocation4 + $0x8] sm:$0xf]
    %v246 = vld [vmem:[#allocation4 + $0xc] sm:$0xf]
    %v247 = vld [vmem:[#allocation4 + $0x10] sm:$0xf]
    %v248 = vld [vmem:[#allocation4 + $0x14] sm:$0xf]
    %v249 = vld [vmem:[#allocation4 + $0x18] sm:$0xf]
    %v250 = vld [vmem:[#allocation4 + $0x1c] sm:$0xf]
    %v251 = vld [vmem:[#allocation4 + $0x20] sm:$0xf]
    %v252 = vld [vmem:[#allocation4 + $0x24] sm:$0xf]
    %v253 = vld [vmem:[#allocation4 + $0x28] sm:$0xf]
    %v254 = vld [vmem:[#allocation4 + $0x2c] sm:$0xf]
    %v255 = vld [vmem:[#allocation4 + $0x30] sm:$0xf]
    %v256 = vld [vmem:[#allocation4 + $0x34] sm:$0xf]
    %v257 = vld [vmem:[#allocation4 + $0x38] sm:$0xf]
    %v258 = vld [vmem:[#allocation4 + $0x3c] sm:$0xf]
    %v259 = vld [vmem:[%s6] sm:$0x1]
    %v261 = vlaneseq
    %v262 = vshrl.u32 %v261, 7
    %v263 = vsub.s32 0, %v262
    %v264 = vrot.slane %v259, %v263
    %v282 = vunpack.c.l.b16 %v243
    %v283 = vunpack.c.l.b16 %v244
    %v284 = vunpack.c.l.b16 %v245
    %v285 = vunpack.c.l.b16 %v246
    %v286 = vunpack.c.l.b16 %v247
    %v287 = vunpack.c.l.b16 %v248
    %v288 = vunpack.c.l.b16 %v249
    %v289 = vunpack.c.l.b16 %v250
    %v290 = vunpack.c.l.b16 %v251
    %v291 = vunpack.c.l.b16 %v252
    %v292 = vunpack.c.l.b16 %v253
    %v293 = vunpack.c.l.b16 %v254
    %v294 = vunpack.c.l.b16 %v255
    %v295 = vunpack.c.l.b16 %v256
    %v296 = vunpack.c.l.b16 %v257
    %v297 = vunpack.c.l.b16 %v258
    %v298 = vpack.c.b16 %v283, %v282
    %v299 = vpack.c.b16 %v285, %v284
    %v300 = vpack.c.b16 %v287, %v286
    %v301 = vpack.c.b16 %v289, %v288
    %v302 = vpack.c.b16 %v291, %v290
    %v303 = vpack.c.b16 %v293, %v292
    %v304 = vpack.c.b16 %v295, %v294
    %v305 = vpack.c.b16 %v297, %v296
    %314 = vmatprep.subr.bf16.mxu0 0
    %315 = vmatpush1.bf16.msra.mxu0 %v298
    %316 = vmatprep.subr.bf16.mxu0 0
    %317 = vmatpush1.bf16.msra.mxu0 %v299
    %318 = vmatprep.subr.bf16.mxu0 0
    %319 = vmatpush1.bf16.msra.mxu0 %v300
    %320 = vmatprep.subr.bf16.mxu0 0
    %321 = vmatpush1.bf16.msra.mxu0 %v301
    %322 = vmatprep.subr.bf16.mxu0 0
    %323 = vmatpush1.bf16.msra.mxu0 %v302
    %324 = vmatprep.subr.bf16.mxu0 0
    %325 = vmatpush1.bf16.msra.mxu0 %v303
    %326 = vmatprep.subr.bf16.mxu0 0
    %327 = vmatpush1.bf16.msra.mxu0 %v304
    %328 = vmatprep.subr.bf16.mxu0 0
    %329 = vmatpush1.bf16.msra.mxu0 %v305
    %330 = vmatprep.subr.bf16.mxu0 0
    %331 = vmatpush1.bf16.msra.mxu0 0
    %332 = vmatprep.subr.bf16.mxu0 0
    %333 = vmatpush1.bf16.msra.mxu0 0
    %334 = vmatprep.subr.bf16.mxu0 0
    %335 = vmatpush1.bf16.msra.mxu0 0
    %336 = vmatprep.subr.bf16.mxu0 0
    %337 = vmatpush1.bf16.msra.mxu0 0
    %338 = vmatprep.subr.bf16.mxu0 0
    %339 = vmatpush1.bf16.msra.mxu0 0
    %340 = vmatprep.subr.bf16.mxu0 0
    %341 = vmatpush1.bf16.msra.mxu0 0
    %342 = vmatprep.subr.bf16.mxu0 0
    %343 = vmatpush1.bf16.msra.mxu0 0
    %344 = vmatprep.subr.bf16.mxu0 0
    %345 = vmatpush1.bf16.msra.mxu0 0
    %346 = vmatprep.mubr.bf16.mxu0 0
    %347 = vmatmul.mubr.bf16.gmra.mrb[0].mxu0 %v242
    %v348 = vpop.f32.mrb[0].mxu0
    %v349 = vadd.f32 %v264, %v348
    %v350 = vpop.f32.mrb[0].mxu0
    %v351 = vpop.f32.mrb[0].mxu0
    %v352 = vadd.f32 %v264, %v351
    %v353 = vpop.f32.mrb[0].mxu0
    %354 = vdwg.mxu0
    %v355 = vld [vmem:[%s7] sm:$0x1]
    %v357 = vlaneseq
    %v358 = vshrl.u32 %v357, 7
    %v359 = vsub.s32 0, %v358
    %v360 = vrot.slane %v355, %v359
    %v362 = vmax.f32 %v349, %v360
    %v363 = vmax.f32 %v352, %v360
    %v364 = vld [vmem:[%s8] sm:$0x1]
    %v366 = vlaneseq
    %v367 = vshrl.u32 %v366, 7
    %v368 = vsub.s32 0, %v367
    %v369 = vrot.slane %v364, %v368
    %v371 = vmin.f32 %v362, %v369
    %v372 = vmin.f32 %v363, %v369
    %373 = vst.msk [vmem:[%s9] sm:$0xff] %vm76, %v371
    %374 = vst.msk [vmem:[%s9 + $0x8] sm:$0xff] %vm76, %v372
    // Predicated region
    $region46: #{tpu_custom_call.1} parent=1 // pred_check
      _
    $region47: #{tpu_custom_call.1} parent=1 // pred_check_branch
      %376 = sbr.rel (0) target = $region49
    $region48: #{tpu_custom_call.1} parent=1 // pred_region
      _
    $region49: #{tpu_custom_call.1} parent=1 // pred_fallthru
      _
    // Predicated region
    $region50: #{tpu_custom_call.1} parent=1 // pred_check
      _
    $region51: #{tpu_custom_call.1} parent=1 // pred_check_branch
      %378 = sbr.rel (0) target = $region53
    $region52: #{tpu_custom_call.1} parent=1 // pred_region
      _
    $region53: #{tpu_custom_call.1} parent=1 // pred_fallthru
      _
    %379 = vsyncpa [#allocation3], 1
    %380 = vsyncpa [#allocation5], 1

</llo_original>
